<compile_context>
chip_gen: v5e
topology: v5e:2x2
jax: 0.10.0
libtpu: 0.0.40
codegen_flags: <defaults>
</compile_context>

<pallas_src>
import functools
import math

import jax
import jax.numpy as jnp
from jax.experimental import pallas as pl
from jax.experimental.pallas import tpu as pltpu


def _round_up(x, m):
    return (x + m - 1) // m * m


def _vmem_budget_bytes():
    """Scoped-VMEM request: ~3/4 of physical VMEM (96 MiB on v5e/v6e, 48 MiB
    on v7x).  Falls back to a v7x-safe 48 MiB if the query is unavailable."""
    try:
        cap = int(pltpu.get_tpu_info().vmem_capacity_bytes)
    except Exception:
        cap = 64 * 1024 * 1024
    return min((cap * 3) // 4, 112 * 1024 * 1024)


def _tile_dim(dim, tmax, align, min_tile):
    """Pick (padded_dim, tile): tile % align == 0, tile <= tmax, tile divides
    padded_dim.  Prefers a divisor of the align-rounded dim (no extra padding);
    otherwise pads up to a multiple of a reasonably large tile."""
    dim_a = _round_up(dim, align)
    tmax_a = max((tmax // align) * align, align)
    if dim_a <= tmax_a:
        return dim_a, dim_a                     # single tile, minimal padding
    floor = max(align, min(min_tile, tmax_a))
    t = tmax_a
    while t >= floor:
        if dim_a % t == 0:
            return dim_a, t
        t -= align
    t = min(tmax_a, max(align, min_tile))
    return _round_up(dim, t), t


def _maybe_cast(a, w, compute_dtype):
    # In-kernel cast of the MXU operands (bf16 MXU on v5e/v6e/v7x); the f32
    # accumulation below is unaffected.  Casting here instead of the wrapper
    # avoids an extra full HBM read/write pass over x and weight.
    if compute_dtype is not None and a.dtype != jnp.dtype(compute_dtype):
        return a.astype(compute_dtype), w.astype(compute_dtype)
    return a, w


# ----------------------------------------------------------------------------
# Small path: lane-dense packed (B, E*OUT) output, batch split across <=2 steps.
# ----------------------------------------------------------------------------
def _make_small_kernel(E, OUT, compute_dtype):
    def kernel(x_ref, w_ref, b_ref, o_ref):
        # x_ref: (E, Bb, IN), w_ref: (E, IN, OUT), b_ref: (E, OUT)
        # o_ref: (Bb, E*OUT)  -- one full-width lane-dense store per step.
        outs = []
        for e in range(E):                      # E is small & static: unrolled.
            a, w = _maybe_cast(x_ref[e], w_ref[e], compute_dtype)
            acc = jnp.dot(a, w, preferred_element_type=jnp.float32)
            acc = acc + b_ref[pl.ds(e, 1), :].astype(jnp.float32)
            outs.append(acc)
        packed = outs[0] if E == 1 else jnp.concatenate(outs, axis=-1)
        o_ref[...] = packed.astype(o_ref.dtype)
    return kernel


def _ensemble_fc_small(x, weight, bias, out_dtype, compute_dtype):
    E, B, IN = x.shape
    OUT = weight.shape[2]
    # Split the batch over two "parallel" grid steps when each half stays
    # sublane-aligned -> both v7x TensorCores get work (no-op on v5e/v6e).
    G = 2 if (B >= 16 and B % 16 == 0) else 1
    Bb = B // G

    packed = pl.pallas_call(
        _make_small_kernel(E, OUT, compute_dtype),
        out_shape=jax.ShapeDtypeStruct((B, E * OUT), out_dtype),
        grid_spec=pltpu.PrefetchScalarGridSpec(
            num_scalar_prefetch=0,
            grid=(G,),
            in_specs=[
                pl.BlockSpec((E, Bb, IN), lambda i: (0, i, 0)),
                pl.BlockSpec((E, IN, OUT), lambda i: (0, 0, 0)),   # resident
                pl.BlockSpec((E, OUT), lambda i: (0, 0)),          # resident
            ],
            out_specs=pl.BlockSpec((Bb, E * OUT), lambda i: (i, 0)),
        ),
        compiler_params=pltpu.CompilerParams(
            dimension_semantics=("parallel",),
            vmem_limit_bytes=32 * 1024 * 1024,
        ),
    )(x, weight, bias)
    # Unpack (B, E*OUT) -> (E, B, OUT) outside the kernel (tiny XLA op).
    return jnp.transpose(packed.reshape(B, E, OUT), (1, 0, 2))


# ----------------------------------------------------------------------------
# Tiled path kernels.
# ----------------------------------------------------------------------------
def _tiled_kernel_single_k(x_ref, w_ref, b_ref, o_ref, *, compute_dtype):
    # Weight-resident path: one K step, no accumulator, no branches.
    a, w = _maybe_cast(x_ref[...], w_ref[...], compute_dtype)
    o_ref[...] = (jnp.dot(a, w, preferred_element_type=jnp.float32)
                  + b_ref[...].astype(jnp.float32)).astype(o_ref.dtype)


def _tiled_kernel_direct(x_ref, w_ref, b_ref, o_ref, *, compute_dtype):
    # f32 output: accumulate directly into the (K-resident) output block.
    k = pl.program_id(3)

    @pl.when(k == 0)
    def _init():
        o_ref[...] = jnp.broadcast_to(b_ref[...].astype(jnp.float32),
                                      o_ref.shape)

    a, w = _maybe_cast(x_ref[...], w_ref[...], compute_dtype)
    o_ref[...] += jnp.dot(a, w, preferred_element_type=jnp.float32)


def _tiled_kernel_acc(x_ref, w_ref, b_ref, o_ref, acc_ref, *, compute_dtype):
    # Non-f32 output: keep an f32 VMEM accumulator, cast once at the end.
    k = pl.program_id(3)

    @pl.when(k == 0)
    def _init():
        acc_ref[...] = jnp.broadcast_to(b_ref[...].astype(jnp.float32),
                                        acc_ref.shape)

    a, w = _maybe_cast(x_ref[...], w_ref[...], compute_dtype)
    acc_ref[...] += jnp.dot(a, w, preferred_element_type=jnp.float32)

    @pl.when(k == pl.num_programs(3) - 1)
    def _store():
        o_ref[...] = acc_ref[...].astype(o_ref.dtype)


def _ensemble_fc_tiled(x, weight, bias, tm, tn, tk, out_dtype, compute_dtype,
                       weight_resident):
    assert tm % 8 == 0 and tn % 128 == 0 and tk % 128 == 0, \
        "tm must be a multiple of 8; tn, tk multiples of 128 (256 preferred)"
    E, B, IN = x.shape
    OUT = weight.shape[2]

    vmem_limit = _vmem_budget_bytes()
    in_itemsize = jnp.dtype(x.dtype).itemsize
    out_itemsize = jnp.dtype(out_dtype).itemsize

    # M / N tiling (prefer a tile that divides the aligned dim: no over-pad).
    B_p, tm_e = _tile_dim(B, tm, 8, 128)
    OUT_p, tn_e = _tile_dim(OUT, tn, 128, 256)

    # K tiling: prefer a single K step (weight tile VMEM-resident across the
    # whole inner loop; no K loop / accumulator traffic) when it fits budget.
    full_k = _round_up(IN, 128)
    single_k_bytes = (2 * (tm_e + tn_e) * full_k * in_itemsize   # dbl-buffered
                      + 2 * tm_e * tn_e * out_itemsize)
    if IN <= tk or (weight_resident
                    and single_k_bytes <= (6 * vmem_limit) // 10):
        IN_p, tk_e = full_k, full_k
    else:
        IN_p, tk_e = _tile_dim(IN, tk, 128, 256)

    # Zero padding: K padding is dot-neutral, padded M/N rows/cols are sliced.
    xp = x if (B_p, IN_p) == (B, IN) else \
        jnp.pad(x, ((0, 0), (0, B_p - B), (0, IN_p - IN)))
    wp = weight if (IN_p, OUT_p) == (IN, OUT) else \
        jnp.pad(weight, ((0, 0), (0, IN_p - IN), (0, OUT_p - OUT)))
    bp = bias if OUT_p == OUT else jnp.pad(bias, ((0, 0), (0, OUT_p - OUT)))

    m_tiles = B_p // tm_e
    n_tiles = OUT_p // tn_e
    k_tiles = IN_p // tk_e

    # Inner-axis selection: with the inner loop over M the x panel is the one
    # re-streamed from HBM (weight held when k_tiles == 1); re-stream the
    # smaller panel.
    m_inner = (n_tiles - 1) * B_p <= (m_tiles - 1) * OUT_p
    if m_inner:
        grid = (E, n_tiles, m_tiles, k_tiles)
        x_map = lambda e, n, m, k: (e, m, k)
        w_map = lambda e, n, m, k: (e, k, n)
        b_map = lambda e, n, m, k: (e, n)
        o_map = lambda e, n, m, k: (e, m, n)
    else:
        grid = (E, m_tiles, n_tiles, k_tiles)
        x_map = lambda e, m, n, k: (e, m, k)
        w_map = lambda e, m, n, k: (e, k, n)
        b_map = lambda e, m, n, k: (e, n)
        o_map = lambda e, m, n, k: (e, m, n)

    if k_tiles == 1:
        kernel = functools.partial(_tiled_kernel_single_k,
                                   compute_dtype=compute_dtype)
        scratch = []
    elif jnp.dtype(out_dtype) == jnp.dtype(jnp.float32):
        kernel = functools.partial(_tiled_kernel_direct,
                                   compute_dtype=compute_dtype)
        scratch = []
    else:
        kernel = functools.partial(_tiled_kernel_acc,
                                   compute_dtype=compute_dtype)
        scratch = [pltpu.VMEM((tm_e, tn_e), jnp.float32)]

    out = pl.pallas_call(
        kernel,
        out_shape=jax.ShapeDtypeStruct((E, B_p, OUT_p), out_dtype),
        grid_spec=pltpu.PrefetchScalarGridSpec(
            num_scalar_prefetch=0,
            grid=grid,
            in_specs=[
                pl.BlockSpec((pl.Squeezed(), tm_e, tk_e), x_map),
                pl.BlockSpec((pl.Squeezed(), tk_e, tn_e), w_map),
                # bias block constant across m and k -> stays VMEM-resident.
                pl.BlockSpec((1, tn_e), b_map),
            ],
            out_specs=pl.BlockSpec((pl.Squeezed(), tm_e, tn_e), o_map),
            scratch_shapes=scratch,
        ),
        compiler_params=pltpu.CompilerParams(
            dimension_semantics=("parallel", "parallel", "parallel",
                                 "arbitrary"),
            vmem_limit_bytes=vmem_limit,
        ),
    )(xp, wp, bp)
    if (B_p, OUT_p) != (B, OUT):
        out = out[:, :B, :OUT]
    return out


# ----------------------------------------------------------------------------
# Public wrapper (matches Ensemble_FC_Layer.forward semantics).
# ----------------------------------------------------------------------------
def ensemble_fc(x, weight, bias=None, *, tm=512, tn=1024, tk=2048,
                compute_dtype=jnp.bfloat16, weight_resident=True,
                small_path_bytes=2 * 1024 * 1024):
    """out[e] = x[e] @ weight[e] + bias[e]  for every ensemble member e.

    compute_dtype=jnp.bfloat16 (default) feeds the MXU bf16 with f32
    accumulation — the fast path on v5e/v6e/v7x.  Pass compute_dtype=None
    for bit-faithful f32 math matching the PyTorch reference.
    """
    E, B, IN = x.shape
    E_w, IN_w, OUT = weight.shape
    assert (E_w, IN_w) == (E, IN), "weight shape mismatch"
    out_dtype = x.dtype
    if bias is None:
        bias = jnp.zeros((E, OUT), dtype=x.dtype)

    itemsize = jnp.dtype(x.dtype).itemsize
    footprint = (itemsize * (E * B * IN + E * IN * OUT)
                 + jnp.dtype(out_dtype).itemsize * (E * OUT + B * E * OUT))
    if footprint <= small_path_bytes and E <= 32:
        return _ensemble_fc_small(x, weight, bias, out_dtype, compute_dtype)
    return _ensemble_fc_tiled(x, weight, bias, tm, tn, tk, out_dtype,
                              compute_dtype, weight_resident)


if __name__ == "__main__":
    key = jax.random.PRNGKey(0)
    k1, k2, k3, k4, k5, k6 = jax.random.split(key, 6)

    def ref_fc(x, w, b):
        return jnp.einsum("ebi,eio->ebo", x, w,
                          precision=jax.lax.Precision.HIGHEST) + b[:, None, :]

    # ---- 1) Small path (lane-packed output, batch split over 2 steps) ------
    E, B, IN, OUT = 4, 16, 32, 32
    bound = math.sqrt(6.0 / (IN * OUT + E * OUT))   # torch xavier fan for 3D w
    w1 = jax.random.uniform(k1, (E, IN, OUT), minval=-bound, maxval=bound,
                            dtype=jnp.float32)
    b1 = 0.1 * jax.random.normal(k2, (E, OUT), dtype=jnp.float32)
    x1 = jax.random.normal(k3, (E, B, IN), dtype=jnp.float32)
    r1 = ref_fc(x1, w1, b1)

    o1_exact = jax.block_until_ready(ensemble_fc(x1, w1, b1, compute_dtype=None))
    assert o1_exact.shape == (E, B, OUT)
    assert jnp.allclose(o1_exact, r1, atol=1e-5, rtol=1e-5)
    o1_fast = jax.block_until_ready(ensemble_fc(x1, w1, b1))   # bf16 MXU default
    assert jnp.allclose(o1_fast, r1, atol=2e-2, rtol=2e-2)

    # ---- 2) Tiled path, default tiles, single-K weight-resident step -------
    E2, B2, IN2, OUT2 = 2, 72, 320, 200
    w2 = 0.05 * jax.random.normal(k4, (E2, IN2, OUT2), dtype=jnp.float32)
    b2 = 1e-3 * jnp.arange(E2 * OUT2, dtype=jnp.float32).reshape(E2, OUT2)
    x2 = jax.random.normal(k5, (E2, B2, IN2), dtype=jnp.float32)
    r2 = ref_fc(x2, w2, b2)

    o2_exact = jax.block_until_ready(
        ensemble_fc(x2, w2, b2, compute_dtype=None, small_path_bytes=0))
    assert jnp.allclose(o2_exact, r2, atol=1e-4, rtol=1e-4)
    o2_fast = jax.block_until_ready(ensemble_fc(x2, w2, b2, small_path_bytes=0))
    assert jnp.allclose(o2_fast, r2, atol=3e-2, rtol=3e-2)

    # ---- 3) Tiled path, multi-tile M/N/K with K accumulation (M inner) -----
    E3, B3, IN3, OUT3 = 2, 40, 300, 260
    w3 = 0.05 * jax.random.normal(k6, (E3, IN3, OUT3), dtype=jnp.float32)
    b3 = 0.01 * jax.random.normal(k1, (E3, OUT3), dtype=jnp.float32)
    x3 = jax.random.normal(k2, (E3, B3, IN3), dtype=jnp.float32)
    r3 = ref_fc(x3, w3, b3)
    o3 = jax.block_until_ready(
        ensemble_fc(x3, w3, b3, tm=16, tn=128, tk=128, compute_dtype=None,
                    small_path_bytes=0, weight_resident=False))
    assert jnp.allclose(o3, r3, atol=1e-4, rtol=1e-4)

    # 3b) Same shapes, bf16 in/out: exercises the f32-scratch accumulator path.
    o3b = jax.block_until_ready(
        ensemble_fc(x3.astype(jnp.bfloat16), w3.astype(jnp.bfloat16),
                    b3.astype(jnp.bfloat16), tm=16, tn=128, tk=128,
                    small_path_bytes=0, weight_resident=False))
    assert o3b.dtype == jnp.bfloat16
    assert jnp.allclose(o3b.astype(jnp.float32), r3, atol=5e-2, rtol=5e-2)

    # ---- 4) Tiled path where N is the inner loop (x held, weight streamed) -
    E4, B4, IN4, OUT4 = 1, 272, 160, 272
    w4 = 0.05 * jax.random.normal(k3, (E4, IN4, OUT4), dtype=jnp.float32)
    b4 = 0.01 * jax.random.normal(k4, (E4, OUT4), dtype=jnp.float32)
    x4 = jax.random.normal(k5, (E4, B4, IN4), dtype=jnp.float32)
    r4 = ref_fc(x4, w4, b4)
    o4 = jax.block_until_ready(
        ensemble_fc(x4, w4, b4, tm=192, tn=128, tk=128, compute_dtype=None,
                    small_path_bytes=0, weight_resident=False))
    assert jnp.allclose(o4, r4, atol=1e-4, rtol=1e-4)

    print("KERNEL_OK")
</pallas_src>

<mosaic_0001>
module attributes {stable_mosaic.version = 11 : i64} {
  func.func @kernel(%arg0: i32, %arg1: memref<4x8x32xf32, #tpu.memory_space<vmem>>, %arg2: memref<4x32x32xf32, #tpu.memory_space<vmem>>, %arg3: memref<4x32xf32, #tpu.memory_space<vmem>>, %arg4: memref<8x128xf32, #tpu.memory_space<vmem>>) attributes {dimension_semantics = [#tpu.dimension_semantics<parallel>], iteration_bounds = array<i64: 2>, scalar_prefetch = 0 : i64, scratch_operands = 0 : i64, tpu.core_type = #tpu.core_type<tc>, window_params = [{transform_indices = @transform_0, window_bounds = array<i64: 4, 8, 32>}, {pipeline_mode = #tpu.pipeline_mode<synchronous>, transform_indices = @transform_1, window_bounds = array<i64: 4, 32, 32>}, {pipeline_mode = #tpu.pipeline_mode<synchronous>, transform_indices = @transform_2, window_bounds = array<i64: 4, 32>}, {transform_indices = @transform_3, window_bounds = array<i64: 8, 128>}]} {
    %c0 = arith.constant 0 : index
    %c0_0 = arith.constant 0 : index
    %c0_1 = arith.constant 0 : index
    %0 = vector.load %arg1[%c0, %c0_0, %c0_1] : memref<4x8x32xf32, #tpu.memory_space<vmem>>, vector<1x8x32xf32>
    %1 = vector.shape_cast %0 : vector<1x8x32xf32> to vector<8x32xf32>
    %c0_2 = arith.constant 0 : index
    %c0_3 = arith.constant 0 : index
    %c0_4 = arith.constant 0 : index
    %2 = vector.load %arg2[%c0_2, %c0_3, %c0_4] : memref<4x32x32xf32, #tpu.memory_space<vmem>>, vector<1x32x32xf32>
    %3 = vector.shape_cast %2 : vector<1x32x32xf32> to vector<32x32xf32>
    %cst = arith.constant dense<0.000000e+00> : vector<8x32xf32>
    %4 = tpu.matmul %1, %3, %cst {dimension_numbers = #tpu.dot_dimension_numbers<[1], [0], [0], [1], [0, 0, 1, 1], [], []>} : vector<8x32xf32>, vector<32x32xf32>, vector<8x32xf32> -> vector<8x32xf32>
    %c0_5 = arith.constant 0 : index
    %c0_6 = arith.constant 0 : index
    %5 = vector.load %arg3[%c0_5, %c0_6] : memref<4x32xf32, #tpu.memory_space<vmem>>, vector<1x32xf32>
    %6 = vector.broadcast %5 : vector<1x32xf32> to vector<8x32xf32>
    %7 = arith.addf %4, %6 : vector<8x32xf32>
    %c1 = arith.constant 1 : index
    %c0_7 = arith.constant 0 : index
    %c0_8 = arith.constant 0 : index
    %8 = vector.load %arg1[%c1, %c0_7, %c0_8] : memref<4x8x32xf32, #tpu.memory_space<vmem>>, vector<1x8x32xf32>
    %9 = vector.shape_cast %8 : vector<1x8x32xf32> to vector<8x32xf32>
    %c1_9 = arith.constant 1 : index
    %c0_10 = arith.constant 0 : index
    %c0_11 = arith.constant 0 : index
    %10 = vector.load %arg2[%c1_9, %c0_10, %c0_11] : memref<4x32x32xf32, #tpu.memory_space<vmem>>, vector<1x32x32xf32>
    %11 = vector.shape_cast %10 : vector<1x32x32xf32> to vector<32x32xf32>
    %cst_12 = arith.constant dense<0.000000e+00> : vector<8x32xf32>
    %12 = tpu.matmul %9, %11, %cst_12 {dimension_numbers = #tpu.dot_dimension_numbers<[1], [0], [0], [1], [0, 0, 1, 1], [], []>} : vector<8x32xf32>, vector<32x32xf32>, vector<8x32xf32> -> vector<8x32xf32>
    %c1_13 = arith.constant 1 : index
    %c0_14 = arith.constant 0 : index
    %13 = vector.load %arg3[%c1_13, %c0_14] : memref<4x32xf32, #tpu.memory_space<vmem>>, vector<1x32xf32>
    %14 = vector.broadcast %13 : vector<1x32xf32> to vector<8x32xf32>
    %15 = arith.addf %12, %14 : vector<8x32xf32>
    %c2 = arith.constant 2 : index
    %c0_15 = arith.constant 0 : index
    %c0_16 = arith.constant 0 : index
    %16 = vector.load %arg1[%c2, %c0_15, %c0_16] : memref<4x8x32xf32, #tpu.memory_space<vmem>>, vector<1x8x32xf32>
    %17 = vector.shape_cast %16 : vector<1x8x32xf32> to vector<8x32xf32>
    %c2_17 = arith.constant 2 : index
    %c0_18 = arith.constant 0 : index
    %c0_19 = arith.constant 0 : index
    %18 = vector.load %arg2[%c2_17, %c0_18, %c0_19] : memref<4x32x32xf32, #tpu.memory_space<vmem>>, vector<1x32x32xf32>
    %19 = vector.shape_cast %18 : vector<1x32x32xf32> to vector<32x32xf32>
    %cst_20 = arith.constant dense<0.000000e+00> : vector<8x32xf32>
    %20 = tpu.matmul %17, %19, %cst_20 {dimension_numbers = #tpu.dot_dimension_numbers<[1], [0], [0], [1], [0, 0, 1, 1], [], []>} : vector<8x32xf32>, vector<32x32xf32>, vector<8x32xf32> -> vector<8x32xf32>
    %c2_21 = arith.constant 2 : index
    %c0_22 = arith.constant 0 : index
    %21 = vector.load %arg3[%c2_21, %c0_22] : memref<4x32xf32, #tpu.memory_space<vmem>>, vector<1x32xf32>
    %22 = vector.broadcast %21 : vector<1x32xf32> to vector<8x32xf32>
    %23 = arith.addf %20, %22 : vector<8x32xf32>
    %c3 = arith.constant 3 : index
    %c0_23 = arith.constant 0 : index
    %c0_24 = arith.constant 0 : index
    %24 = vector.load %arg1[%c3, %c0_23, %c0_24] : memref<4x8x32xf32, #tpu.memory_space<vmem>>, vector<1x8x32xf32>
    %25 = vector.shape_cast %24 : vector<1x8x32xf32> to vector<8x32xf32>
    %c3_25 = arith.constant 3 : index
    %c0_26 = arith.constant 0 : index
    %c0_27 = arith.constant 0 : index
    %26 = vector.load %arg2[%c3_25, %c0_26, %c0_27] : memref<4x32x32xf32, #tpu.memory_space<vmem>>, vector<1x32x32xf32>
    %27 = vector.shape_cast %26 : vector<1x32x32xf32> to vector<32x32xf32>
    %cst_28 = arith.constant dense<0.000000e+00> : vector<8x32xf32>
    %28 = tpu.matmul %25, %27, %cst_28 {dimension_numbers = #tpu.dot_dimension_numbers<[1], [0], [0], [1], [0, 0, 1, 1], [], []>} : vector<8x32xf32>, vector<32x32xf32>, vector<8x32xf32> -> vector<8x32xf32>
    %c3_29 = arith.constant 3 : index
    %c0_30 = arith.constant 0 : index
    %29 = vector.load %arg3[%c3_29, %c0_30] : memref<4x32xf32, #tpu.memory_space<vmem>>, vector<1x32xf32>
    %30 = vector.broadcast %29 : vector<1x32xf32> to vector<8x32xf32>
    %31 = arith.addf %28, %30 : vector<8x32xf32>
    %32 = tpu.concatenate %7, %15, %23, %31 in 1 : vector<8x32xf32>, vector<8x32xf32>, vector<8x32xf32>, vector<8x32xf32> -> vector<8x128xf32>
    %c0_31 = arith.constant 0 : index
    %c0_32 = arith.constant 0 : index
    %33 = vector.load %arg4[%c0_31, %c0_32] : memref<8x128xf32, #tpu.memory_space<vmem>>, vector<8x128xf32>
    tpu.vector_store %arg4[%c0_31, %c0_32], %32 {strides = array<i32>} : memref<8x128xf32, #tpu.memory_space<vmem>>, vector<8x128xf32>,
    return
  }
  func.func @transform_0(%arg0: i32) -> (i32, i32, i32) {
    %c0_i32 = arith.constant 0 : i32
    %c0_i32_0 = arith.constant 0 : i32
    %c0_i32_1 = arith.constant 0 : i32
    return %c0_i32, %arg0, %c0_i32_0 : i32, i32, i32
  }
  func.func @transform_1(%arg0: i32) -> (i32, i32, i32) {
    %c0_i32 = arith.constant 0 : i32
    %c0_i32_0 = arith.constant 0 : i32
    %c0_i32_1 = arith.constant 0 : i32
    %c0_i32_2 = arith.constant 0 : i32
    return %c0_i32, %c0_i32_0, %c0_i32_1 : i32, i32, i32
  }
  func.func @transform_2(%arg0: i32) -> (i32, i32) {
    %c0_i32 = arith.constant 0 : i32
    %c0_i32_0 = arith.constant 0 : i32
    %c0_i32_1 = arith.constant 0 : i32
    return %c0_i32, %c0_i32_0 : i32, i32
  }
  func.func @transform_3(%arg0: i32) -> (i32, i32) {
    %c0_i32 = arith.constant 0 : i32
    %c0_i32_0 = arith.constant 0 : i32
    return %arg0, %c0_i32 : i32, i32
  }
}

</mosaic_0001>

<llo_original>
// kernel: tpu_custom_call.1
$region0: #{tpu_custom_call.1}
  #allocation0 [shape = 'u32[]', space=smem, size = 0x4, offset = 0x4, fixed_abs, tag = 'smem constant byte address 0x4 - core index']
  #allocation1 [shape = 'u32[72,128]{1,0:T(1,128)}', space=vmem, size = 0x9000, scoped, tag = 'internal scratch']
  %s0 = inlined_call_operand.hbm [shape: f32[4,16,32], index: 0, kind: input, shape index: {}]
  %s1 = inlined_call_operand.hbm [shape: f32[4,32,32], index: 1, kind: input, shape index: {}]
  %s2 = inlined_call_operand.hbm [shape: f32[4,32], index: 2, kind: input, shape index: {}]
  %s3 = inlined_call_operand.hbm [shape: f32[16,128], index: 3, kind: output, shape index: {}]
  %s4 = sld [smem:[#allocation0]]
  $region57: #{tpu_custom_call.1} parent=0
    _
  %s6 = ssub.s32 1, %s4
  %s7 = scalar_select 0, %s6, %s4
  $region1: #{tpu_custom_call.1} parent=0
    #allocation2 [shape = 'u8[32768]{0}', space=vmem, size = 0x8000, scoped, tag = 'input window, operand 0']
    #allocation3 [shape = 's32[2]{0}', space=sflag, size = 0x8, scoped, tag = 'scoped memory for tpu_custom_call.1']
    #allocation4 [shape = 's32[2]{0}', space=sflag, size = 0x8, scoped, tag = 'scoped memory for tpu_custom_call.1']
    #allocation5 [shape = 'u8[65536]{0}', space=vmem, size = 0x10000, scoped, tag = 'input window, operand 1, single buffered']
    #allocation6 [shape = 's32[1]{0}', space=sflag, size = 0x4, scoped, tag = 'scoped memory for tpu_custom_call.1']
    #allocation7 [shape = 'u8[2048]{0}', space=vmem, size = 0x800, scoped, tag = 'input window, operand 2, single buffered']
    #allocation8 [shape = 'u8[8192]{0}', space=vmem, size = 0x2000, scoped, tag = 'output window, operand 0']
    %8 = vsyncpa [#allocation3], 0
    %s9 = scalar_lea.sflag [#allocation3], 1
    %10 = vsyncpa %s9, 0
    %11 = vsyncpa [#allocation6], 0
    %12 = vsyncpa [#allocation4], 0
    %s13 = scalar_lea.sflag [#allocation4], 1
    %14 = vsyncpa %s13, 0
    loop: start=0, step=1, limit=4
    $region2: #{tpu_custom_call.1} parent=1 // loop_pre_header
      _
    $region3: #{tpu_custom_call.1} parent=1 // loop_header
      %s16 = sphi 0, %s20
      %p17 = scmp.ge.s32.totalorder %s16, 4
      %s26 = sphi 0, %s28
      %s29 = sphi 0, %s26
      %s30 = sphi 0, %s29
      %s46 = sphi 0, %s30
      %s50 = sphi 0, %s50
      %s52 = sphi 0, %s50
      %s53 = sphi 0, %s52
      %s67 = sphi 0, %s53
      %s71 = sphi 0, %s71
      %s73 = sphi 0, %s71
      %s74 = sphi 0, %s73
      %s88 = sphi 0, %s74
      %s94 = sphi 0, %s96
      %s97 = sphi 0, %s94
      %s98 = sphi 0, %s97
      %s114 = sphi 0, %s98
    $region4: #{tpu_custom_call.1} parent=1 // loop_header_branch
      %19 = sbr.rel (%p17) target = $region8
    $region5: #{tpu_custom_call.1} parent=1 // loop_body
      %s21 = ssub.s32 %s16, 1
      %s22 = ssub.s32 %s16, 2
      %s23 = sadd.s32 %s16, 1
      %s24 = ssub.s32 %s16, %s23
      %p25 = scmp.eq.s32.totalorder %s24, 0
      %s27 = sadd.s32 %s26, 1
      %s28 = scalar_select %p25, %s26, %s27
      %p31 = pneg %p25
      %p32 = scmp.eq.s32.totalorder %s16, 1
      %p33 = por %p31, %p32
      %p34 = scmp.ne.s32.totalorder %s26, %s29
      %p35 = scmp.eq.s32.totalorder %s16, 0
      %p36 = por %p34, %p35
      %p37 = scmp.ne.s32.totalorder %s26, %s29
      %p38 = scmp.eq.s32.totalorder %s21, 1
      %p39 = por %p37, %p38
      %p40 = scmp.ne.s32.totalorder %s29, %s30
      %p41 = scmp.eq.s32.totalorder %s21, 0
      %p42 = por %p40, %p41
      %p43 = scmp.ne.s32.totalorder %s29, %s30
      %p44 = scmp.eq.s32.totalorder %s22, 1
      %p45 = por %p43, %p44
      %p47 = scmp.ne.s32.totalorder %s30, %s46
      %p48 = scmp.eq.s32.totalorder %s22, 0
      %p49 = por %p47, %p48
      %s51 = sadd.s32 %s50, 1
      %p54 = scmp.eq.s32.totalorder %s16, 1
      %p55 = scmp.ne.s32.totalorder %s50, %s52
      %p56 = scmp.eq.s32.totalorder %s16, 0
      %p57 = por %p55, %p56
      %p58 = scmp.ne.s32.totalorder %s50, %s52
      %p59 = scmp.eq.s32.totalorder %s21, 1
      %p60 = por %p58, %p59
      %p61 = scmp.ne.s32.totalorder %s52, %s53
      %p62 = scmp.eq.s32.totalorder %s21, 0
      %p63 = por %p61, %p62
      %p64 = scmp.ne.s32.totalorder %s52, %s53
      %p65 = scmp.eq.s32.totalorder %s22, 1
      %p66 = por %p64, %p65
      %p68 = scmp.ne.s32.totalorder %s53, %s67
      %p69 = scmp.eq.s32.totalorder %s22, 0
      %p70 = por %p68, %p69
      %s72 = sadd.s32 %s71, 1
      %p75 = scmp.eq.s32.totalorder %s16, 1
      %p76 = scmp.ne.s32.totalorder %s71, %s73
      %p77 = scmp.eq.s32.totalorder %s16, 0
      %p78 = por %p76, %p77
      %p79 = scmp.ne.s32.totalorder %s71, %s73
      %p80 = scmp.eq.s32.totalorder %s21, 1
      %p81 = por %p79, %p80
      %p82 = scmp.ne.s32.totalorder %s73, %s74
      %p83 = scmp.eq.s32.totalorder %s21, 0
      %p84 = por %p82, %p83
      %p85 = scmp.ne.s32.totalorder %s73, %s74
      %p86 = scmp.eq.s32.totalorder %s22, 1
      %p87 = por %p85, %p86
      %p89 = scmp.ne.s32.totalorder %s74, %s88
      %p90 = scmp.eq.s32.totalorder %s22, 0
      %p91 = por %p89, %p90
      %s92 = ssub.s32 %s16, %s23
      %p93 = scmp.eq.s32.totalorder %s92, 0
      %s95 = sadd.s32 %s94, 1
      %s96 = scalar_select %p93, %s94, %s95
      %p99 = pneg %p93
      %p100 = scmp.eq.s32.totalorder %s16, 1
      %p101 = por %p99, %p100
      %p102 = scmp.ne.s32.totalorder %s94, %s97
      %p103 = scmp.eq.s32.totalorder %s16, 0
      %p104 = por %p102, %p103
      %p105 = scmp.ne.s32.totalorder %s94, %s97
      %p106 = scmp.eq.s32.totalorder %s21, 1
      %p107 = por %p105, %p106
      %p108 = scmp.ne.s32.totalorder %s97, %s98
      %p109 = scmp.eq.s32.totalorder %s21, 0
      %p110 = por %p108, %p109
      %p111 = scmp.ne.s32.totalorder %s97, %s98
      %p112 = scmp.eq.s32.totalorder %s22, 1
      %p113 = por %p111, %p112
      %p115 = scmp.ne.s32.totalorder %s98, %s114
      %p116 = scmp.eq.s32.totalorder %s22, 0
      %p117 = por %p115, %p116
      %p118 = scmp.le.s32.totalorder 1, %s16
      %p119 = scmp.lt.s32.totalorder %s16, 3
      %p120 = pnand %p118, %p119
      %p121 = pneg %p120
      // Predicated region
      $region9: #{tpu_custom_call.1} parent=5 // pred_check
        _
      $region10: #{tpu_custom_call.1} parent=5 // pred_check_branch
        %123 = sbr.rel (%p120) target = $region12
      $region11: #{tpu_custom_call.1} parent=5 // pred_region
        %s124 = ssub.s32 %s16, 1
        // Predicated region
        $region13: #{tpu_custom_call.1} parent=11 // pred_check
          %p125 = pneg %p63
        $region14: #{tpu_custom_call.1} parent=11 // pred_check_branch
          %127 = sbr.rel (%p125) target = $region16
        $region15: #{tpu_custom_call.1} parent=11 // pred_region
          %129 = vsyncadd [#allocation6], 0
          %s130 = sshll.u32 %s1, 4
          %s131 = int_to_ptr.hbm [resolvable:$true] %s130
          %s132 = sshll.u32 [#allocation5], 4
          %s133 = int_to_ptr.vmem [resolvable:$true] %s132
          %138 = dma.hbm_to_vmem [thread:$0]  %s131, 2048, %s133, [#allocation6], 128, 128, 8
        $region16: #{tpu_custom_call.1} parent=11 // pred_fallthru
          _
        // Predicated region
        $region17: #{tpu_custom_call.1} parent=11 // pred_check
          %p139 = pneg %p84
        $region18: #{tpu_custom_call.1} parent=11 // pred_check_branch
          %141 = sbr.rel (%p139) target = $region20
        $region19: #{tpu_custom_call.1} parent=11 // pred_region
          %143 = vsyncadd [#allocation6], 0
          %s145 = sshll.u32 %s2, 4
          %s146 = int_to_ptr.hbm [resolvable:$true] %s145
          %s147 = sshll.u32 [#allocation7], 4
          %s148 = int_to_ptr.vmem [resolvable:$true] %s147
          %150 = dma.hbm_to_vmem [thread:$0]  %s146, 64, %s148, [#allocation6]
        $region20: #{tpu_custom_call.1} parent=11 // pred_fallthru
          _
      $region12: #{tpu_custom_call.1} parent=5 // pred_fallthru
        _
      %p151 = scmp.lt.s32.totalorder %s16, 2
      // Predicated region
      $region21: #{tpu_custom_call.1} parent=5 // pred_check
        %p152 = pneg %p151
      $region22: #{tpu_custom_call.1} parent=5 // pred_check_branch
        %154 = sbr.rel (%p152) target = $region24
      $region23: #{tpu_custom_call.1} parent=5 // pred_region
        // Predicated region
        $region25: #{tpu_custom_call.1} parent=23 // pred_check
          %p155 = pneg %p36
        $region26: #{tpu_custom_call.1} parent=23 // pred_check_branch
          %157 = sbr.rel (%p155) target = $region28
        $region27: #{tpu_custom_call.1} parent=23 // pred_region
          %s158 = sand.u32 %s26, 1
          %s159 = scalar_lea.sflag [#allocation3], %s158
          %s160 = sand.u32 %s26, 1
          %s161 = smul.addr %s160, 32
          %s162 = scalar_lea.vmem [#allocation2], %s161
          %164 = vsyncadd %s159, 0
          %s165 = smul.addr %s16, 8
          %s166 = scalar_lea.hbm %s0, %s165
          %s167 = sshll.u32 %s166, 4
          %s168 = int_to_ptr.hbm [resolvable:$true] %s167
          %s169 = sshll.u32 %s162, 4
          %s170 = int_to_ptr.vmem [resolvable:$true] %s169
          %175 = dma.hbm_to_vmem [thread:$0]  %s168, 512, %s170, %s159, 256, 128, 8
        $region28: #{tpu_custom_call.1} parent=23 // pred_fallthru
          _
      $region24: #{tpu_custom_call.1} parent=5 // pred_fallthru
        _
      %p176 = scmp.le.s32.totalorder 1, %s16
      %p177 = scmp.lt.s32.totalorder %s16, 3
      %p178 = pnand %p176, %p177
      %p179 = pneg %p178
      // Predicated region
      $region29: #{tpu_custom_call.1} parent=5 // pred_check
        _
      $region30: #{tpu_custom_call.1} parent=5 // pred_check_branch
        %181 = sbr.rel (%p178) target = $region32
      $region31: #{tpu_custom_call.1} parent=5 // pred_region
        %s182 = ssub.s32 %s16, 1
        %s183 = sand.u32 %s29, 1
        %s184 = scalar_lea.sflag [#allocation3], %s183
        %s185 = sand.u32 %s29, 1
        %s186 = smul.addr %s185, 32
        %s187 = scalar_lea.vmem [#allocation2], %s186
        // Predicated region
        $region33: #{tpu_custom_call.1} parent=31 // pred_check
          %p188 = pneg %p42
        $region34: #{tpu_custom_call.1} parent=31 // pred_check_branch
          %190 = sbr.rel (%p188) target = $region36
        $region35: #{tpu_custom_call.1} parent=31 // pred_region
          %192 = dma.done %s184, 512
        $region36: #{tpu_custom_call.1} parent=31 // pred_fallthru
          _
        // Predicated region
        $region37: #{tpu_custom_call.1} parent=31 // pred_check
          %p193 = pneg %p63
        $region38: #{tpu_custom_call.1} parent=31 // pred_check_branch
          %195 = sbr.rel (%p193) target = $region40
        $region39: #{tpu_custom_call.1} parent=31 // pred_region
          %197 = dma.done [#allocation6], 2048
        $region40: #{tpu_custom_call.1} parent=31 // pred_fallthru
          _
        // Predicated region
        $region41: #{tpu_custom_call.1} parent=31 // pred_check
          %p198 = pneg %p84
        $region42: #{tpu_custom_call.1} parent=31 // pred_check_branch
          %200 = sbr.rel (%p198) target = $region44
        $region43: #{tpu_custom_call.1} parent=31 // pred_region
          %202 = dma.done [#allocation6], 64
        $region44: #{tpu_custom_call.1} parent=31 // pred_fallthru
          _
        %s203 = sand.u32 %s29, 1
        %s204 = scalar_lea.sflag [#allocation3], %s203
        %s205 = sand.u32 %s29, 1
        %s206 = smul.addr %s205, 32
        %s207 = scalar_lea.vmem [#allocation2], %s206
        %p208 = pneg %p42
        %p209 = pneg %p39
        %p210 = pneg %p63
        %p211 = pneg %p60
        %p212 = pneg %p84
        %p213 = pneg %p81
        %p214 = pneg %p110
        %p215 = pneg %p107
        %s216 = sand.u32 %s97, 1
        %s217 = scalar_lea.sflag [#allocation4], %s216
        %s218 = sand.u32 %s97, 1
        %s219 = smul.addr %s218, 8
        %s220 = scalar_lea.vmem [#allocation8], %s219
        %v221 = vld [vmem:[%s187] sm:$0xff]
        %v222 = vld [vmem:[#allocation5] sm:$0xff]
        %v223 = vld [vmem:[#allocation5 + $0x8] sm:$0xff]
        %v224 = vld [vmem:[#allocation5 + $0x10] sm:$0xff]
        %v225 = vld [vmem:[#allocation5 + $0x18] sm:$0xff]
        %v226 = vld [vmem:[#allocation7] sm:$0x1]
        %v227 = vperm.slane %v226, 0
        %vm228 = vcmask 261120
        %v230 = vsel %vm228, %v221, 0
        %232 = vmatpush.msra.mxu0 0.0
        %233 = vmatpush.msra.mxu0 0.0
        %234 = vmatpush.msra.mxu0 0.0
        %235 = vmatpush.msra.mxu0 0.0
        %236 = vmatpush.msra.mxu0 0.0
        %237 = vmatpush.msra.mxu0 0.0
        %238 = vmatpush.msra.mxu0 0.0
        %239 = vmatpush.msra.mxu0 0.0
        %240 = vmatpush.msra.mxu0 0.0
        %241 = vmatpush.msra.mxu0 0.0
        %242 = vmatpush.msra.mxu0 0.0
        %243 = vmatpush.msra.mxu0 0.0
        %244 = vmatpush.msra.mxu0 %v225
        %245 = vmatpush.msra.mxu0 %v224
        %246 = vmatpush.msra.mxu0 %v223
        %247 = vmatpush.msra.mxu0 %v222
        %248 = vmatmul.f32.gmra.mxu0 %v230
        %v249 = vpop.f32.mrf.mxu0
        %v250 = vadd.f32 %v227, %v249
        %251 = vdwg.mxu0
        %s252 = scalar_lea.vmem %s187, 8 [#allocation2]
        %v253 = vld [vmem:[%s252] sm:$0xff]
        %s254 = scalar_lea.vmem [#allocation5], 32
        %v255 = vld [vmem:[%s254] sm:$0xff]
        %v256 = vld [vmem:[%s254 + $0x8] sm:$0xff]
        %v257 = vld [vmem:[%s254 + $0x10] sm:$0xff]
        %v258 = vld [vmem:[%s254 + $0x18] sm:$0xff]
        %v259 = vld [vmem:[#allocation7 + $0x1] sm:$0x1]
        %v260 = vperm.slane %v259, 0
        %v262 = vsel %vm228, %v253, 0
        %264 = vmatpush.msra.mxu0 0.0
        %265 = vmatpush.msra.mxu0 0.0
        %266 = vmatpush.msra.mxu0 0.0
        %267 = vmatpush.msra.mxu0 0.0
        %268 = vmatpush.msra.mxu0 0.0
        %269 = vmatpush.msra.mxu0 0.0
        %270 = vmatpush.msra.mxu0 0.0
        %271 = vmatpush.msra.mxu0 0.0
        %272 = vmatpush.msra.mxu0 0.0
        %273 = vmatpush.msra.mxu0 0.0
        %274 = vmatpush.msra.mxu0 0.0
        %275 = vmatpush.msra.mxu0 0.0
        %276 = vmatpush.msra.mxu0 %v258
        %277 = vmatpush.msra.mxu0 %v257
        %278 = vmatpush.msra.mxu0 %v256
        %279 = vmatpush.msra.mxu0 %v255
        %280 = vmatmul.f32.gmra.mxu0 %v262
        %v281 = vpop.f32.mrf.mxu0
        %v282 = vadd.f32 %v260, %v281
        %283 = vdwg.mxu0
        %s284 = scalar_lea.vmem %s187, 16 [#allocation2]
        %v285 = vld [vmem:[%s284] sm:$0xff]
        %s286 = scalar_lea.vmem [#allocation5], 64
        %v287 = vld [vmem:[%s286] sm:$0xff]
        %v288 = vld [vmem:[%s286 + $0x8] sm:$0xff]
        %v289 = vld [vmem:[%s286 + $0x10] sm:$0xff]
        %v290 = vld [vmem:[%s286 + $0x18] sm:$0xff]
        %v291 = vld [vmem:[#allocation7 + $0x2] sm:$0x1]
        %v292 = vperm.slane %v291, 0
        %v294 = vsel %vm228, %v285, 0
        %296 = vmatpush.msra.mxu0 0.0
        %297 = vmatpush.msra.mxu0 0.0
        %298 = vmatpush.msra.mxu0 0.0
        %299 = vmatpush.msra.mxu0 0.0
        %300 = vmatpush.msra.mxu0 0.0
        %301 = vmatpush.msra.mxu0 0.0
        %302 = vmatpush.msra.mxu0 0.0
        %303 = vmatpush.msra.mxu0 0.0
        %304 = vmatpush.msra.mxu0 0.0
        %305 = vmatpush.msra.mxu0 0.0
        %306 = vmatpush.msra.mxu0 0.0
        %307 = vmatpush.msra.mxu0 0.0
        %308 = vmatpush.msra.mxu0 %v290
        %309 = vmatpush.msra.mxu0 %v289
        %310 = vmatpush.msra.mxu0 %v288
        %311 = vmatpush.msra.mxu0 %v287
        %312 = vmatmul.f32.gmra.mxu0 %v294
        %v313 = vpop.f32.mrf.mxu0
        %v314 = vadd.f32 %v292, %v313
        %315 = vdwg.mxu0
        %s316 = scalar_lea.vmem %s187, 24 [#allocation2]
        %v317 = vld [vmem:[%s316] sm:$0xff]
        %s318 = scalar_lea.vmem [#allocation5], 96
        %v319 = vld [vmem:[%s318] sm:$0xff]
        %v320 = vld [vmem:[%s318 + $0x8] sm:$0xff]
        %v321 = vld [vmem:[%s318 + $0x10] sm:$0xff]
        %v322 = vld [vmem:[%s318 + $0x18] sm:$0xff]
        %v323 = vld [vmem:[#allocation7 + $0x3] sm:$0x1]
        %v324 = vperm.slane %v323, 0
        %v326 = vsel %vm228, %v317, 0
        %328 = vmatpush.msra.mxu0 0.0
        %329 = vmatpush.msra.mxu0 0.0
        %330 = vmatpush.msra.mxu0 0.0
        %331 = vmatpush.msra.mxu0 0.0
        %332 = vmatpush.msra.mxu0 0.0
        %333 = vmatpush.msra.mxu0 0.0
        %334 = vmatpush.msra.mxu0 0.0
        %335 = vmatpush.msra.mxu0 0.0
        %336 = vmatpush.msra.mxu0 0.0
        %337 = vmatpush.msra.mxu0 0.0
        %338 = vmatpush.msra.mxu0 0.0
        %339 = vmatpush.msra.mxu0 0.0
        %340 = vmatpush.msra.mxu0 %v322
        %341 = vmatpush.msra.mxu0 %v321
        %342 = vmatpush.msra.mxu0 %v320
        %343 = vmatpush.msra.mxu0 %v319
        %344 = vmatmul.f32.gmra.mxu0 %v326
        %v345 = vpop.f32.mrf.mxu0
        %v346 = vadd.f32 %v324, %v345
        %347 = vdwg.mxu0
        %349 = vrot.lane.b32.xlu0 %v282, 32
        %v350 = vpop.permute.xlu0 %349
        %353 = vrot.lane.b32.xlu0 %v314, 64
        %v354 = vpop.permute.xlu0 %353
        %357 = vrot.lane.b32.xlu0 %v346, 96
        %v358 = vpop.permute.xlu0 %357
        %v360 = vsel %vm228, %v250, %v350
        %vm361 = vcmask 523264
        %v362 = vsel %vm361, %v360, %v354
        %vm363 = vcmask 785408
        %v364 = vsel %vm363, %v362, %v358
        %365 = vst [vmem:[%s220] sm:$0xff] %v364
        %s366 = sand.u32 %s97, 1
        %s367 = scalar_lea.sflag [#allocation4], %s366
        %s368 = sand.u32 %s97, 1
        %s369 = smul.addr %s368, 8
        %s370 = scalar_lea.vmem [#allocation8], %s369
        // Predicated region
        $region45: #{tpu_custom_call.1} parent=31 // pred_check
          %p371 = pneg %p107
        $region46: #{tpu_custom_call.1} parent=31 // pred_check_branch
          %373 = sbr.rel (%p371) target = $region48
        $region47: #{tpu_custom_call.1} parent=31 // pred_region
          %375 = vsyncadd %s367, 0
          %s376 = smul.addr %s21, 8
          %s377 = scalar_lea.hbm %s3, %s376
          %s379 = sshll.u32 %s370, 4
          %s380 = int_to_ptr.vmem [resolvable:$true] %s379
          %s381 = sshll.u32 %s377, 4
          %s382 = int_to_ptr.hbm [resolvable:$true] %s381
          %384 = dma.vmem_to_hbm [thread:$0]  %s380, 128, %s382, %s367
        $region48: #{tpu_custom_call.1} parent=31 // pred_fallthru
          _
      $region32: #{tpu_custom_call.1} parent=5 // pred_fallthru
        _
      %p385 = scmp.le.s32.totalorder 2, %s16
      // Predicated region
      $region49: #{tpu_custom_call.1} parent=5 // pred_check
        %p386 = pneg %p385
      $region50: #{tpu_custom_call.1} parent=5 // pred_check_branch
        %388 = sbr.rel (%p386) target = $region52
      $region51: #{tpu_custom_call.1} parent=5 // pred_region
        %s389 = ssub.s32 %s16, 2
        // Predicated region
        $region53: #{tpu_custom_call.1} parent=51 // pred_check
          %p390 = pneg %p113
        $region54: #{tpu_custom_call.1} parent=51 // pred_check_branch
          %392 = sbr.rel (%p390) target = $region56
        $region55: #{tpu_custom_call.1} parent=51 // pred_region
          %s393 = sand.u32 %s98, 1
          %s394 = scalar_lea.sflag [#allocation4], %s393
          %s395 = sand.u32 %s98, 1
          %s396 = smul.addr %s395, 8
          %s397 = scalar_lea.vmem [#allocation8], %s396
          %399 = dma.done %s394, 128
        $region56: #{tpu_custom_call.1} parent=51 // pred_fallthru
          _
      $region52: #{tpu_custom_call.1} parent=5 // pred_fallthru
        _
    $region6: #{tpu_custom_call.1} parent=1 // loop_footer
      %s20 = sadd.s32 1, %s16
    $region7: #{tpu_custom_call.1} parent=1 // loop_footer_branch
      %15 = sbr.rel target = $region3
    $region8: #{tpu_custom_call.1} parent=1 // loop_exit
      _
    %400 = vsyncpa [#allocation3], 1
    %s401 = scalar_lea.sflag [#allocation3], 1
    %402 = vsyncpa %s401, 1
    %403 = vsyncpa [#allocation6], 1
    %404 = vsyncpa [#allocation4], 1
    %s405 = scalar_lea.sflag [#allocation4], 1
    %406 = vsyncpa %s405, 1

</llo_original>
